<compile_context>
chip_gen: v6e
topology: v6e:2x2x1
jax: 0.10.0
libtpu: 0.0.40
codegen_flags: <defaults>
</compile_context>

<pallas_src>
import functools

import jax
import jax.numpy as jnp
import numpy as np
from jax.experimental import pallas as pl
from jax.experimental.pallas import tpu as pltpu


def _round_up(x, m):
    return ((x + m - 1) // m) * m


def _attn_pool_kernel(x_ref, wqkv_ref, bqkv_ref, o_ref, *, scale, block_k):
    TB, S, D_in = x_ref.shape
    three_hp = wqkv_ref.shape[1]
    hp = three_hp // 3
    cdt = x_ref.dtype                      # MXU operand dtype (bf16 stays bf16)

    # ---- Fused Q/K/V projection: one wide MXU matmul, M = TB*S, N = 3*hp. ----
    # (S should be a multiple of 8 for f32 / 16 for bf16 so these reshapes are
    #  layout-preserving; otherwise Mosaic inserts VMEM copies but stays correct.)
    x2 = x_ref[...].reshape(TB * S, D_in)
    qkv = jnp.dot(x2, wqkv_ref[...], preferred_element_type=jnp.float32)
    qkv = (qkv + bqkv_ref[...].astype(jnp.float32)).astype(cdt)
    qkv = qkv.reshape(TB, S, three_hp)

    # Lane-aligned slices (hp is a multiple of 128); padded tail columns are zero.
    q = qkv[:, :, 0 * hp:1 * hp]
    k = qkv[:, :, 1 * hp:2 * hp]
    v = qkv[:, :, 2 * hp:3 * hp]

    if S <= block_k:
        # ---- Single key block: plain softmax + exact column-sum pooling trick. ----
        #   sum_q (softmax_q @ V) == (sum_q softmax_q) @ V
        s = jnp.einsum("bqh,bkh->bqk", q, k,
                       preferred_element_type=jnp.float32) * scale        # (TB,S,S)
        m = jnp.max(s, axis=-1, keepdims=True)
        p = jnp.exp(s - m)
        l = jnp.sum(p, axis=-1, keepdims=True)
        w = jnp.sum(p / l, axis=1)                                          # (TB,S)
        # The remaining contraction has M=1: do it on VPU/XLU instead of the MXU.
        pooled = jnp.sum(w[:, :, None] * v, axis=1)                         # (TB,hp) f32
    else:
        # ---- Flash-style online softmax over static key blocks. ----
        # Bounds score memory to O(TB*S*block_k); the loop is a short static unroll.
        m = jnp.full((TB, S, 1), -jnp.inf, dtype=jnp.float32)
        l = jnp.zeros((TB, S, 1), dtype=jnp.float32)
        acc = jnp.zeros((TB, S, hp), dtype=jnp.float32)
        for start in range(0, S, block_k):
            size = min(block_k, S - start)
            kb = k[:, start:start + size, :]
            vb = v[:, start:start + size, :]
            s = jnp.einsum("bqh,bkh->bqk", q, kb,
                           preferred_element_type=jnp.float32) * scale      # (TB,S,size)
            m_new = jnp.maximum(m, jnp.max(s, axis=-1, keepdims=True))
            alpha = jnp.exp(m - m_new)
            p = jnp.exp(s - m_new)
            l = alpha * l + jnp.sum(p, axis=-1, keepdims=True)
            acc = alpha * acc + jnp.einsum("bqk,bkh->bqh", p.astype(cdt), vb,
                                           preferred_element_type=jnp.float32)
            m = m_new
        pooled = jnp.sum(acc / l, axis=1)                                    # (TB,hp) f32

    o_ref[...] = pooled.astype(o_ref.dtype)


def prepare_attention_pool_params(wq, bq, wk, bk, wv, bv, *, lane=128):
    """One-time parameter preprocessing (hoisted out of the per-call forward path).

    w*: (D_in, H) (torch Linear weight transposed); b*: (H,) or (1, H).
    Each head is zero-padded to a 128-lane multiple and the three projections are
    concatenated so the kernel runs a single fused QKV matmul.
    """
    D_in, H = wq.shape
    hp = _round_up(H, lane)

    def pad_w(w):
        return jnp.pad(w, ((0, 0), (0, hp - H)))

    def pad_b(b):
        return jnp.pad(jnp.reshape(b, (1, H)), ((0, 0), (0, hp - H)))

    wqkv = jnp.concatenate([pad_w(wq), pad_w(wk), pad_w(wv)], axis=1)   # (D_in, 3*hp)
    bqkv = jnp.concatenate([pad_b(bq), pad_b(bk), pad_b(bv)], axis=1)   # (1, 3*hp)
    return wqkv, bqkv


def _auto_block_b(B, S, D_in, hp, itemsize, block_k, vmem_budget):
    """Largest batch tile (multiple of 8) whose VMEM working set fits the budget."""
    fixed = D_in * 3 * hp * 4 + 3 * hp * 4 + (2 << 20)        # 1-buffered weight + slack
    per_row = (
        2 * S * D_in * itemsize          # x block (double-buffered)
        + 2 * hp * itemsize              # out block (double-buffered)
        + S * 3 * hp * (4 + itemsize)    # f32 projection result + q/k/v in input dtype
        + S * hp * 4                     # f32 flash accumulator
        + 2 * S * 512                    # m/l stats ((.,.,1) lane-padded layout)
        + 3 * S * block_k * 4            # score / prob temporaries
    )
    cap = max((vmem_budget - fixed) // per_row, 8)
    tb = max(min(cap, _round_up(B, 8), 1024) // 8 * 8, 8)
    # v7x has two TensorCores: keep >= 2 "parallel" grid steps when the batch allows.
    if B > 8 and -(-B // tb) < 2:
        tb = max(_round_up(-(-B // 2), 8), 8)
    return tb


def attention_pool(x, wqkv, bqkv, hidden_dim, *, block_b=None, block_k=512,
                   vmem_limit_bytes=32 * 1024 * 1024, interpret=False):
    """AttentionPool forward.  x: (B, S, D_in); fused params from
    prepare_attention_pool_params; returns (B, hidden_dim)."""
    B, S, D_in = x.shape
    three_hp = wqkv.shape[1]
    hp = three_hp // 3
    assert 3 * hp == three_hp and hp % 128 == 0 and hidden_dim <= hp

    itemsize = jnp.dtype(x.dtype).itemsize
    # Key-block size: whole sequence when it fits, else a sublane-aligned tile.
    bk = S if S <= block_k else max((block_k // 8) * 8, 8)

    if block_b is None:
        tb = _auto_block_b(B, S, D_in, hp, itemsize, bk,
                           int(vmem_limit_bytes * 0.75))
    else:
        tb = max(_round_up(block_b, 8), 8)

    grid = (pl.cdiv(B, tb),)

    nk = -(-S // bk)
    flops = 2 * B * S * D_in * 3 * hp + 2 * B * S * S * hp
    if nk > 1:
        flops += 2 * B * S * S * hp          # P @ V in the flash path
    cost = pl.CostEstimate(
        flops=int(flops),
        transcendentals=int(B * S * S),
        bytes_accessed=int(B * S * D_in * itemsize
                           + wqkv.size * wqkv.dtype.itemsize
                           + bqkv.size * bqkv.dtype.itemsize
                           + B * hp * itemsize),
    )

    kernel = functools.partial(_attn_pool_kernel,
                               scale=1.0 / (hidden_dim ** 0.5), block_k=bk)

    out = pl.pallas_call(
        kernel,
        out_shape=jax.ShapeDtypeStruct((B, hp), x.dtype),
        grid=grid,
        in_specs=[
            # x: TB batch rows per step.  No host-side batch pad: the last block may
            # overhang B; overhanging rows are batch-row-independent garbage that is
            # never written back.
            pl.BlockSpec((tb, S, D_in), lambda b: (b, 0, 0)),
            # Fused QKV weight / bias: constant block -> resident; single-buffer them
            # so the resident weight does not burn 2x VMEM.
            pl.BlockSpec((D_in, three_hp), lambda b: (0, 0),
                         pipeline_mode=pl.Buffered(1)),
            pl.BlockSpec((1, three_hp), lambda b: (0, 0),
                         pipeline_mode=pl.Buffered(1)),
        ],
        out_specs=pl.BlockSpec((tb, hp), lambda b: (b, 0)),    # lane-dense store
        compiler_params=pltpu.CompilerParams(
            dimension_semantics=("parallel",),                 # shard batch across TCs
            vmem_limit_bytes=vmem_limit_bytes,
        ),
        cost_estimate=cost,
        interpret=interpret,
    )(x, wqkv, bqkv)

    return out[:, :hidden_dim]


def _reference(x, wq, bq, wk, bk, wv, bv):
    q = x @ wq + bq
    k = x @ wk + bk
    v = x @ wv + bv
    scale = 1.0 / (q.shape[-1] ** 0.5)
    s = jnp.einsum("bqh,bkh->bqk", q, k) * scale
    p = jax.nn.softmax(s, axis=-1)
    attn = jnp.einsum("bqk,bkh->bqh", p, v)
    return attn.sum(axis=1)


if __name__ == "__main__":
    key = jax.random.PRNGKey(0)
    kx, kwq, kbq, kwk, kbk, kwv, kbv, kx2 = jax.random.split(key, 8)

    B, S, D_in, H = 2, 8, 16, 32
    x = jax.random.normal(kx, (B, S, D_in), dtype=jnp.float32)
    # torch Linear stores weight (H, D_in), bias (H,); we keep the weight transposed
    # as (D_in, H) and the bias as (H,).
    wq = jax.random.normal(kwq, (D_in, H), dtype=jnp.float32) * 0.1
    bq = jax.random.normal(kbq, (H,), dtype=jnp.float32) * 0.1
    wk = jax.random.normal(kwk, (D_in, H), dtype=jnp.float32) * 0.1
    bk = jax.random.normal(kbk, (H,), dtype=jnp.float32) * 0.1
    wv = jax.random.normal(kwv, (D_in, H), dtype=jnp.float32) * 0.1
    bv = jax.random.normal(kbv, (H,), dtype=jnp.float32) * 0.1

    # One-time parameter preprocessing (kept out of the per-call path).
    wqkv, bqkv = prepare_attention_pool_params(wq, bq, wk, bk, wv, bv)

    # Single-key-block path.
    out = jax.block_until_ready(attention_pool(x, wqkv, bqkv, H))
    ref = jax.block_until_ready(_reference(x, wq, bq, wk, bk, wv, bv))
    np.testing.assert_allclose(np.asarray(out), np.asarray(ref), rtol=2e-3, atol=2e-3)

    # Flash (multi key-block) path: S=16 with block_k=8 -> two key blocks.
    S2 = 16
    x2 = jax.random.normal(kx2, (B, S2, D_in), dtype=jnp.float32)
    out2 = jax.block_until_ready(attention_pool(x2, wqkv, bqkv, H, block_k=8))
    ref2 = jax.block_until_ready(_reference(x2, wq, bq, wk, bk, wv, bv))
    np.testing.assert_allclose(np.asarray(out2), np.asarray(ref2), rtol=2e-3, atol=2e-3)

    print("KERNEL_OK")
</pallas_src>

<mosaic_0001>
module attributes {stable_mosaic.version = 11 : i64} {
  func.func @_attn_pool_kernel(%arg0: i32, %arg1: memref<8x8x16xf32, #tpu.memory_space<vmem>>, %arg2: memref<16x384xf32, #tpu.memory_space<vmem>>, %arg3: memref<1x384xf32, #tpu.memory_space<vmem>>, %arg4: memref<8x128xf32, #tpu.memory_space<vmem>>) attributes {dimension_semantics = [#tpu.dimension_semantics<parallel>], iteration_bounds = array<i64: 1>, scalar_prefetch = 0 : i64, scratch_operands = 0 : i64, tpu.core_type = #tpu.core_type<tc>, window_params = [{transform_indices = @transform_0, window_bounds = array<i64: 8, 8, 16>}, {pipeline_mode = #tpu.pipeline_mode<synchronous>, transform_indices = @transform_1, window_bounds = array<i64: 16, 384>}, {pipeline_mode = #tpu.pipeline_mode<synchronous>, transform_indices = @transform_2, window_bounds = array<i64: 1, 384>}, {transform_indices = @transform_3, window_bounds = array<i64: 8, 128>}]} {
    %c0 = arith.constant 0 : index
    %c0_0 = arith.constant 0 : index
    %c0_1 = arith.constant 0 : index
    %0 = vector.load %arg1[%c0, %c0_0, %c0_1] : memref<8x8x16xf32, #tpu.memory_space<vmem>>, vector<8x8x16xf32>
    %1 = vector.shape_cast %0 : vector<8x8x16xf32> to vector<64x16xf32>
    %c0_2 = arith.constant 0 : index
    %c0_3 = arith.constant 0 : index
    %2 = vector.load %arg2[%c0_2, %c0_3] : memref<16x384xf32, #tpu.memory_space<vmem>>, vector<16x384xf32>
    %cst = arith.constant dense<0.000000e+00> : vector<64x384xf32>
    %3 = tpu.matmul %1, %2, %cst {dimension_numbers = #tpu.dot_dimension_numbers<[1], [0], [0], [1], [0, 0, 1, 1], [], []>} : vector<64x16xf32>, vector<16x384xf32>, vector<64x384xf32> -> vector<64x384xf32>
    %c0_4 = arith.constant 0 : index
    %c0_5 = arith.constant 0 : index
    %4 = vector.load %arg3[%c0_4, %c0_5] : memref<1x384xf32, #tpu.memory_space<vmem>>, vector<1x384xf32>
    %5 = vector.broadcast %4 : vector<1x384xf32> to vector<64x384xf32>
    %6 = arith.addf %3, %5 : vector<64x384xf32>
    %7 = vector.shape_cast %6 : vector<64x384xf32> to vector<8x8x384xf32>
    %8 = vector.extract_strided_slice %7 {offsets = [0, 0, 0], sizes = [8, 8, 128], strides = [1, 1, 1]} : vector<8x8x384xf32> to vector<8x8x128xf32>
    %9 = vector.extract_strided_slice %7 {offsets = [0, 0, 128], sizes = [8, 8, 128], strides = [1, 1, 1]} : vector<8x8x384xf32> to vector<8x8x128xf32>
    %10 = vector.extract_strided_slice %7 {offsets = [0, 0, 256], sizes = [8, 8, 128], strides = [1, 1, 1]} : vector<8x8x384xf32> to vector<8x8x128xf32>
    "tpu.trace_start"() <{level = 10 : i32, message = "bqh,bkh->bqk"}> : () -> ()
    %cst_6 = arith.constant dense<0.000000e+00> : vector<8x8x8xf32>
    %11 = tpu.matmul %8, %9, %cst_6 {dimension_numbers = #tpu.dot_dimension_numbers<[2], [2], [1], [1], [0, 0, 0, 1, 1, 1], [0], [0]>} : vector<8x8x128xf32>, vector<8x8x128xf32>, vector<8x8x8xf32> -> vector<8x8x8xf32>
    "tpu.trace_stop"() : () -> ()
    %cst_7 = arith.constant 0.176776692 : f32
    %12 = vector.broadcast %cst_7 : f32 to vector<8x8x8xf32>
    %13 = arith.mulf %11, %12 : vector<8x8x8xf32>
    %cst_8 = arith.constant dense<0xFF800000> : vector<8x8xf32>
    %14 = vector.multi_reduction <maximumf>, %13, %cst_8 [2] : vector<8x8x8xf32> to vector<8x8xf32>
    %15 = vector.shape_cast %14 : vector<8x8xf32> to vector<8x8x1xf32>
    %16 = vector.broadcast %15 : vector<8x8x1xf32> to vector<8x8x8xf32>
    %17 = arith.subf %13, %16 : vector<8x8x8xf32>
    %18 = math.exp %17 : vector<8x8x8xf32>
    %cst_9 = arith.constant dense<0.000000e+00> : vector<8x8xf32>
    %19 = vector.multi_reduction <add>, %18, %cst_9 [2] : vector<8x8x8xf32> to vector<8x8xf32>
    %20 = vector.shape_cast %19 : vector<8x8xf32> to vector<8x8x1xf32>
    %21 = vector.broadcast %20 : vector<8x8x1xf32> to vector<8x8x8xf32>
    %22 = arith.divf %18, %21 : vector<8x8x8xf32>
    %cst_10 = arith.constant dense<0.000000e+00> : vector<8x8xf32>
    %23 = vector.multi_reduction <add>, %22, %cst_10 [1] : vector<8x8x8xf32> to vector<8x8xf32>
    %24 = vector.shape_cast %23 : vector<8x8xf32> to vector<8x8x1xf32>
    %25 = vector.broadcast %24 : vector<8x8x1xf32> to vector<8x8x128xf32>
    %26 = arith.mulf %25, %10 : vector<8x8x128xf32>
    %cst_11 = arith.constant dense<0.000000e+00> : vector<8x128xf32>
    %27 = vector.multi_reduction <add>, %26, %cst_11 [1] : vector<8x8x128xf32> to vector<8x128xf32>
    %c0_12 = arith.constant 0 : index
    %c0_13 = arith.constant 0 : index
    %28 = vector.load %arg4[%c0_12, %c0_13] : memref<8x128xf32, #tpu.memory_space<vmem>>, vector<8x128xf32>
    tpu.vector_store %arg4[%c0_12, %c0_13], %27 {strides = array<i32>} : memref<8x128xf32, #tpu.memory_space<vmem>>, vector<8x128xf32>,
    return
  }
  func.func @transform_0(%arg0: i32) -> (i32, i32, i32) {
    %c0_i32 = arith.constant 0 : i32
    %c0_i32_0 = arith.constant 0 : i32
    %c0_i32_1 = arith.constant 0 : i32
    return %arg0, %c0_i32, %c0_i32_0 : i32, i32, i32
  }
  func.func @transform_1(%arg0: i32) -> (i32, i32) {
    %c0_i32 = arith.constant 0 : i32
    %c0_i32_0 = arith.constant 0 : i32
    %c0_i32_1 = arith.constant 0 : i32
    return %c0_i32, %c0_i32_0 : i32, i32
  }
  func.func @transform_2(%arg0: i32) -> (i32, i32) {
    %c0_i32 = arith.constant 0 : i32
    %c0_i32_0 = arith.constant 0 : i32
    %c0_i32_1 = arith.constant 0 : i32
    return %c0_i32, %c0_i32_0 : i32, i32
  }
  func.func @transform_3(%arg0: i32) -> (i32, i32) {
    %c0_i32 = arith.constant 0 : i32
    %c0_i32_0 = arith.constant 0 : i32
    return %arg0, %c0_i32 : i32, i32
  }
}

</mosaic_0001>

<llo_original>
// kernel: tpu_custom_call.1
$region0: #{tpu_custom_call.1}
  #allocation0 [shape = 'u32[]', space=smem, size = 0x4, offset = 0x4, fixed_abs, tag = 'smem constant byte address 0x4 - core index']
  #allocation1 [shape = 'u32[144,128]{1,0:T(1,128)}', space=vmem, size = 0x12000, scoped, tag = 'internal scratch']
  %s0 = inlined_call_operand.hbm [shape: f32[2,8,16], index: 0, kind: input, shape index: {}]
  %s1 = inlined_call_operand.hbm [shape: f32[16,384], index: 1, kind: input, shape index: {}]
  %s2 = inlined_call_operand.vmem [shape: f32[1,384], index: 2, kind: input, shape index: {}]
  %s3 = inlined_call_operand.hbm [shape: f32[2,128], index: 3, kind: output, shape index: {}]
  %s4 = sld [smem:[#allocation0]]
  $region30: #{tpu_custom_call.1} parent=0
    _
  %s6 = ssub.s32 1, %s4
  %s7 = scalar_select 0, %s6, %s4
  $region1: #{tpu_custom_call.1} parent=0
    #allocation2 [shape = 'u8[32768]{0}', space=vmem, size = 0x8000, scoped, tag = 'input window, operand 0, single buffered']
    #allocation3 [shape = 's32[1]{0}', space=sflag, size = 0x4, scoped, tag = 'scoped memory for tpu_custom_call.1']
    #allocation4 [shape = 's32[1]{0}', space=sflag, size = 0x4, scoped, tag = 'scoped memory for tpu_custom_call.1']
    #allocation5 [shape = 'u8[24576]{0}', space=vmem, size = 0x6000, scoped, tag = 'input window, operand 1, single buffered']
    #allocation6 [shape = 's32[1]{0}', space=sflag, size = 0x4, scoped, tag = 'scoped memory for tpu_custom_call.1']
    #allocation7 [shape = 'u8[4096]{0}', space=vmem, size = 0x1000, scoped, tag = 'output window, operand 0, single buffered']
    %8 = vsyncpa [#allocation3], 0
    %9 = vsyncpa [#allocation6], 0
    %10 = vsyncpa [#allocation4], 0
    // Predicated region
    $region2: #{tpu_custom_call.1} parent=1 // pred_check
      _
    $region3: #{tpu_custom_call.1} parent=1 // pred_check_branch
      %12 = sbr.rel (0) target = $region5
    $region4: #{tpu_custom_call.1} parent=1 // pred_region
      %s14 = ssub.s32 1024, 256
      %15 = vsyncadd [#allocation3], %s14
      %s16 = sshll.u32 [#allocation2], 4
      %s17 = int_to_ptr.vmem [resolvable:$true] %s16
      %22 = dma.hbm_to_vmem [thread:$0]  %s0, 256, %s17, [#allocation3], 128, 128, 8
    $region5: #{tpu_custom_call.1} parent=1 // pred_fallthru
      _
    // Predicated region
    $region6: #{tpu_custom_call.1} parent=1 // pred_check
      _
    $region7: #{tpu_custom_call.1} parent=1 // pred_check_branch
      %24 = sbr.rel (0) target = $region9
    $region8: #{tpu_custom_call.1} parent=1 // pred_region
      %s26 = ssub.s32 768, 768
      %27 = vsyncadd [#allocation6], %s26
      %s28 = sshll.u32 [#allocation5], 4
      %s29 = int_to_ptr.vmem [resolvable:$true] %s28
      %34 = dma.hbm_to_vmem [thread:$0]  %s1, 768, %s29, [#allocation6], 384, 384, 24
    $region9: #{tpu_custom_call.1} parent=1 // pred_fallthru
      _
    // Predicated region
    $region10: #{tpu_custom_call.1} parent=1 // pred_check
      _
    $region11: #{tpu_custom_call.1} parent=1 // pred_check_branch
      %36 = sbr.rel (0) target = $region13
    $region12: #{tpu_custom_call.1} parent=1 // pred_region
      _
    $region13: #{tpu_custom_call.1} parent=1 // pred_fallthru
      _
    // Predicated region
    $region14: #{tpu_custom_call.1} parent=1 // pred_check
      _
    $region15: #{tpu_custom_call.1} parent=1 // pred_check_branch
      %38 = sbr.rel (0) target = $region17
    $region16: #{tpu_custom_call.1} parent=1 // pred_region
      %39 = dma.done [#allocation3], 1024
    $region17: #{tpu_custom_call.1} parent=1 // pred_fallthru
      _
    // Predicated region
    $region18: #{tpu_custom_call.1} parent=1 // pred_check
      _
    $region19: #{tpu_custom_call.1} parent=1 // pred_check_branch
      %41 = sbr.rel (0) target = $region21
    $region20: #{tpu_custom_call.1} parent=1 // pred_region
      %42 = dma.done [#allocation6], 768
    $region21: #{tpu_custom_call.1} parent=1 // pred_fallthru
      _
    %v43 = vld [vmem:[#allocation2] sm:$0xff]
    %v44 = vld [vmem:[#allocation2 + $0x8] sm:$0xff]
    %v45 = vld [vmem:[#allocation2 + $0x10] sm:$0xff]
    %v46 = vld [vmem:[#allocation2 + $0x18] sm:$0xff]
    %v47 = vld [vmem:[#allocation2 + $0x20] sm:$0xff]
    %v48 = vld [vmem:[#allocation2 + $0x28] sm:$0xff]
    %v49 = vld [vmem:[#allocation2 + $0x30] sm:$0xff]
    %v50 = vld [vmem:[#allocation2 + $0x38] sm:$0xff]
    %v51 = vld [vmem:[#allocation5] sm:$0xff]
    %v52 = vld [vmem:[#allocation5 + $0x8] sm:$0xff]
    %v53 = vld [vmem:[#allocation5 + $0x10] sm:$0xff]
    %v54 = vld [vmem:[#allocation5 + $0x18] sm:$0xff]
    %v55 = vld [vmem:[#allocation5 + $0x20] sm:$0xff]
    %v56 = vld [vmem:[#allocation5 + $0x28] sm:$0xff]
    %v57 = vld [vmem:[%s2] sm:$0x7]
    %v59 = vlaneseq
    %v60 = vshrl.u32 %v59, 7
    %v61 = vsub.s32 0, %v60
    %v62 = vrot.slane %v57, %v61
    %v63 = vlaneseq
    %v64 = vshrl.u32 %v63, 7
    %v65 = vsub.s32 1, %v64
    %v66 = vrot.slane %v57, %v65
    %v67 = vlaneseq
    %v68 = vshrl.u32 %v67, 7
    %v69 = vsub.s32 2, %v68
    %v70 = vrot.slane %v57, %v69
    %vm74 = vcmask 130048
    %v76 = vsel %vm74, %v43, 0
    %v79 = vsel %vm74, %v44, 0
    %v82 = vsel %vm74, %v45, 0
    %v85 = vsel %vm74, %v46, 0
    %v88 = vsel %vm74, %v47, 0
    %v91 = vsel %vm74, %v48, 0
    %v94 = vsel %vm74, %v49, 0
    %v97 = vsel %vm74, %v50, 0
    %99 = vmatprep.subr.mxu0 0.0
    %100 = vmatpush1.msra.mxu0 0.0
    %101 = vmatprep.subr.mxu0 0.0
    %102 = vmatpush1.msra.mxu0 0.0
    %103 = vmatprep.subr.mxu0 0.0
    %104 = vmatpush1.msra.mxu0 0.0
    %105 = vmatprep.subr.mxu0 0.0
    %106 = vmatpush1.msra.mxu0 0.0
    %107 = vmatprep.subr.mxu0 0.0
    %108 = vmatpush1.msra.mxu0 0.0
    %109 = vmatprep.subr.mxu0 0.0
    %110 = vmatpush1.msra.mxu0 0.0
    %111 = vmatprep.subr.mxu0 0.0
    %112 = vmatpush1.msra.mxu0 0.0
    %113 = vmatprep.subr.mxu0 0.0
    %114 = vmatpush1.msra.mxu0 0.0
    %115 = vmatprep.subr.mxu0 0.0
    %116 = vmatpush1.msra.mxu0 0.0
    %117 = vmatprep.subr.mxu0 0.0
    %118 = vmatpush1.msra.mxu0 0.0
    %119 = vmatprep.subr.mxu0 0.0
    %120 = vmatpush1.msra.mxu0 0.0
    %121 = vmatprep.subr.mxu0 0.0
    %122 = vmatpush1.msra.mxu0 0.0
    %123 = vmatprep.subr.mxu0 0.0
    %124 = vmatpush1.msra.mxu0 0.0
    %125 = vmatprep.subr.mxu0 0.0
    %126 = vmatpush1.msra.mxu0 0.0
    %127 = vmatprep.subr.mxu0 %v55
    %128 = vmatpush1.msra.mxu0 %v54
    %129 = vmatprep.subr.mxu0 %v52
    %130 = vmatpush1.msra.mxu0 %v51
    %131 = vmatprep.subr.mxu0 0.0
    %132 = vmatpush2.msra.mxu0 0.0
    %133 = vmatprep.subr.mxu0 0.0
    %134 = vmatpush2.msra.mxu0 0.0
    %135 = vmatprep.subr.mxu0 0.0
    %136 = vmatpush2.msra.mxu0 0.0
    %137 = vmatprep.subr.mxu0 0.0
    %138 = vmatpush2.msra.mxu0 0.0
    %139 = vmatprep.subr.mxu0 0.0
    %140 = vmatpush2.msra.mxu0 0.0
    %141 = vmatprep.subr.mxu0 0.0
    %142 = vmatpush2.msra.mxu0 0.0
    %143 = vmatprep.subr.mxu0 0.0
    %144 = vmatpush2.msra.mxu0 0.0
    %145 = vmatprep.subr.mxu0 0.0
    %146 = vmatpush2.msra.mxu0 0.0
    %147 = vmatprep.subr.mxu0 0.0
    %148 = vmatpush2.msra.mxu0 0.0
    %149 = vmatprep.subr.mxu0 0.0
    %150 = vmatpush2.msra.mxu0 0.0
    %151 = vmatprep.subr.mxu0 0.0
    %152 = vmatpush2.msra.mxu0 0.0
    %153 = vmatprep.subr.mxu0 0.0
    %154 = vmatpush2.msra.mxu0 0.0
    %155 = vmatprep.subr.mxu0 0.0
    %156 = vmatpush2.msra.mxu0 0.0
    %157 = vmatprep.subr.mxu0 0.0
    %158 = vmatpush2.msra.mxu0 0.0
    %159 = vmatprep.subr.mxu0 0.0
    %160 = vmatpush2.msra.mxu0 0.0
    %161 = vmatprep.subr.mxu0 0.0
    %162 = vmatpush2.msra.mxu0 0.0
    %163 = vmatprep.mubr.f32.mxu0 0.0
    %164 = vmatmul.mubr.f32.gmra.mxu0 %v76
    %v165 = vpop.f32.mrf.mxu0
    %v166 = vadd.f32 %v62, %v165
    %v167 = vpop.f32.mrf.mxu0
    %v168 = vadd.f32 %v66, %v167
    %169 = vmatprep.mubr.f32.mxu0 0.0
    %170 = vmatmul.mubr.f32.gmra.mxu0 %v79
    %v171 = vpop.f32.mrf.mxu0
    %v172 = vadd.f32 %v62, %v171
    %v173 = vpop.f32.mrf.mxu0
    %v174 = vadd.f32 %v66, %v173
    %175 = vmatprep.mubr.f32.mxu0 0.0
    %176 = vmatmul.mubr.f32.gmra.mxu0 %v82
    %v177 = vpop.f32.mrf.mxu0
    %v178 = vadd.f32 %v62, %v177
    %v179 = vpop.f32.mrf.mxu0
    %v180 = vadd.f32 %v66, %v179
    %181 = vmatprep.mubr.f32.mxu0 0.0
    %182 = vmatmul.mubr.f32.gmra.mxu0 %v85
    %v183 = vpop.f32.mrf.mxu0
    %v184 = vadd.f32 %v62, %v183
    %v185 = vpop.f32.mrf.mxu0
    %v186 = vadd.f32 %v66, %v185
    %187 = vmatprep.mubr.f32.mxu0 0.0
    %188 = vmatmul.mubr.f32.gmra.mxu0 %v88
    %v189 = vpop.f32.mrf.mxu0
    %v190 = vadd.f32 %v62, %v189
    %v191 = vpop.f32.mrf.mxu0
    %v192 = vadd.f32 %v66, %v191
    %193 = vmatprep.mubr.f32.mxu0 0.0
    %194 = vmatmul.mubr.f32.gmra.mxu0 %v91
    %v195 = vpop.f32.mrf.mxu0
    %v196 = vadd.f32 %v62, %v195
    %v197 = vpop.f32.mrf.mxu0
    %v198 = vadd.f32 %v66, %v197
    %199 = vmatprep.mubr.f32.mxu0 0.0
    %200 = vmatmul.mubr.f32.gmra.mxu0 %v94
    %v201 = vpop.f32.mrf.mxu0
    %v202 = vadd.f32 %v62, %v201
    %v203 = vpop.f32.mrf.mxu0
    %v204 = vadd.f32 %v66, %v203
    %205 = vmatprep.mubr.f32.mxu0 0.0
    %206 = vmatmul.mubr.f32.gmra.mxu0 %v97
    %v207 = vpop.f32.mrf.mxu0
    %v208 = vadd.f32 %v62, %v207
    %v209 = vpop.f32.mrf.mxu0
    %v210 = vadd.f32 %v66, %v209
    %211 = vdwg.mxu0
    %212 = vmatprep.subr.mxu0 0.0
    %213 = vmatpush1.msra.mxu0 0.0
    %214 = vmatprep.subr.mxu0 0.0
    %215 = vmatpush1.msra.mxu0 0.0
    %216 = vmatprep.subr.mxu0 0.0
    %217 = vmatpush1.msra.mxu0 0.0
    %218 = vmatprep.subr.mxu0 0.0
    %219 = vmatpush1.msra.mxu0 0.0
    %220 = vmatprep.subr.mxu0 0.0
    %221 = vmatpush1.msra.mxu0 0.0
    %222 = vmatprep.subr.mxu0 0.0
    %223 = vmatpush1.msra.mxu0 0.0
    %224 = vmatprep.subr.mxu0 0.0
    %225 = vmatpush1.msra.mxu0 0.0
    %226 = vmatprep.subr.mxu0 0.0
    %227 = vmatpush1.msra.mxu0 0.0
    %228 = vmatprep.subr.mxu0 0.0
    %229 = vmatpush1.msra.mxu0 0.0
    %230 = vmatprep.subr.mxu0 0.0
    %231 = vmatpush1.msra.mxu0 0.0
    %232 = vmatprep.subr.mxu0 0.0
    %233 = vmatpush1.msra.mxu0 0.0
    %234 = vmatprep.subr.mxu0 0.0
    %235 = vmatpush1.msra.mxu0 0.0
    %236 = vmatprep.subr.mxu0 0.0
    %237 = vmatpush1.msra.mxu0 0.0
    %238 = vmatprep.subr.mxu0 0.0
    %239 = vmatpush1.msra.mxu0 0.0
    %240 = vmatprep.subr.mxu0 0.0
    %241 = vmatpush1.msra.mxu0 %v56
    %242 = vmatprep.subr.mxu0 0.0
    %243 = vmatpush1.msra.mxu0 %v53
    %244 = vmatprep.subr.mxu0 0.0
    %245 = vmatpush2.msra.mxu0 0.0
    %246 = vmatprep.subr.mxu0 0.0
    %247 = vmatpush2.msra.mxu0 0.0
    %248 = vmatprep.subr.mxu0 0.0
    %249 = vmatpush2.msra.mxu0 0.0
    %250 = vmatprep.subr.mxu0 0.0
    %251 = vmatpush2.msra.mxu0 0.0
    %252 = vmatprep.subr.mxu0 0.0
    %253 = vmatpush2.msra.mxu0 0.0
    %254 = vmatprep.subr.mxu0 0.0
    %255 = vmatpush2.msra.mxu0 0.0
    %256 = vmatprep.subr.mxu0 0.0
    %257 = vmatpush2.msra.mxu0 0.0
    %258 = vmatprep.subr.mxu0 0.0
    %259 = vmatpush2.msra.mxu0 0.0
    %260 = vmatprep.subr.mxu0 0.0
    %261 = vmatpush2.msra.mxu0 0.0
    %262 = vmatprep.subr.mxu0 0.0
    %263 = vmatpush2.msra.mxu0 0.0
    %264 = vmatprep.subr.mxu0 0.0
    %265 = vmatpush2.msra.mxu0 0.0
    %266 = vmatprep.subr.mxu0 0.0
    %267 = vmatpush2.msra.mxu0 0.0
    %268 = vmatprep.subr.mxu0 0.0
    %269 = vmatpush2.msra.mxu0 0.0
    %270 = vmatprep.subr.mxu0 0.0
    %271 = vmatpush2.msra.mxu0 0.0
    %272 = vmatprep.subr.mxu0 0.0
    %273 = vmatpush2.msra.mxu0 0.0
    %274 = vmatprep.subr.mxu0 0.0
    %275 = vmatpush2.msra.mxu0 0.0
    %276 = vmatprep.mubr.f32.mxu0 0.0
    %277 = vmatmul.mubr.f32.gmra.mxu0 %v76
    %v278 = vpop.f32.mrf.mxu0
    %v279 = vadd.f32 %v70, %v278
    %v280 = vpop.f32.mrf.mxu0
    %281 = vmatprep.mubr.f32.mxu0 0.0
    %282 = vmatmul.mubr.f32.gmra.mxu0 %v79
    %v283 = vpop.f32.mrf.mxu0
    %v284 = vadd.f32 %v70, %v283
    %v285 = vpop.f32.mrf.mxu0
    %286 = vmatprep.mubr.f32.mxu0 0.0
    %287 = vmatmul.mubr.f32.gmra.mxu0 %v82
    %v288 = vpop.f32.mrf.mxu0
    %v289 = vadd.f32 %v70, %v288
    %v290 = vpop.f32.mrf.mxu0
    %291 = vmatprep.mubr.f32.mxu0 0.0
    %292 = vmatmul.mubr.f32.gmra.mxu0 %v85
    %v293 = vpop.f32.mrf.mxu0
    %v294 = vadd.f32 %v70, %v293
    %v295 = vpop.f32.mrf.mxu0
    %296 = vmatprep.mubr.f32.mxu0 0.0
    %297 = vmatmul.mubr.f32.gmra.mxu0 %v88
    %v298 = vpop.f32.mrf.mxu0
    %v299 = vadd.f32 %v70, %v298
    %v300 = vpop.f32.mrf.mxu0
    %301 = vmatprep.mubr.f32.mxu0 0.0
    %302 = vmatmul.mubr.f32.gmra.mxu0 %v91
    %v303 = vpop.f32.mrf.mxu0
    %v304 = vadd.f32 %v70, %v303
    %v305 = vpop.f32.mrf.mxu0
    %306 = vmatprep.mubr.f32.mxu0 0.0
    %307 = vmatmul.mubr.f32.gmra.mxu0 %v94
    %v308 = vpop.f32.mrf.mxu0
    %v309 = vadd.f32 %v70, %v308
    %v310 = vpop.f32.mrf.mxu0
    %311 = vmatprep.mubr.f32.mxu0 0.0
    %312 = vmatmul.mubr.f32.gmra.mxu0 %v97
    %v313 = vpop.f32.mrf.mxu0
    %v314 = vadd.f32 %v70, %v313
    %v315 = vpop.f32.mrf.mxu0
    %316 = vdwg.mxu0
    %317 = vmatprep.subr.mxu0 0.0
    %318 = vmatpush1.xpose.msra.mxu0 0.0
    %319 = vmatprep.subr.mxu0 0.0
    %320 = vmatpush1.xpose.msra.mxu0 0.0
    %321 = vmatprep.subr.mxu0 0.0
    %322 = vmatpush1.xpose.msra.mxu0 0.0
    %323 = vmatprep.subr.mxu0 0.0
    %324 = vmatpush1.xpose.msra.mxu0 0.0
    %325 = vmatprep.subr.mxu0 0.0
    %326 = vmatpush1.xpose.msra.mxu0 0.0
    %327 = vmatprep.subr.mxu0 0.0
    %328 = vmatpush1.xpose.msra.mxu0 0.0
    %329 = vmatprep.subr.mxu0 0.0
    %330 = vmatpush1.xpose.msra.mxu0 0.0
    %331 = vmatprep.subr.mxu0 0.0
    %332 = vmatpush1.xpose.msra.mxu0 0.0
    %333 = vmatprep.subr.mxu0 0.0
    %334 = vmatpush1.xpose.msra.mxu0 0.0
    %335 = vmatprep.subr.mxu0 0.0
    %336 = vmatpush1.xpose.msra.mxu0 0.0
    %337 = vmatprep.subr.mxu0 0.0
    %338 = vmatpush1.xpose.msra.mxu0 0.0
    %339 = vmatprep.subr.mxu0 0.0
    %340 = vmatpush1.xpose.msra.mxu0 0.0
    %341 = vmatprep.subr.mxu0 0.0
    %342 = vmatpush1.xpose.msra.mxu0 0.0
    %343 = vmatprep.subr.mxu0 0.0
    %344 = vmatpush1.xpose.msra.mxu0 0.0
    %345 = vmatprep.subr.mxu0 0.0
    %346 = vmatpush1.xpose.msra.mxu0 0.0
    %347 = vmatprep.subr.mxu0 0.0
    %348 = vmatpush1.xpose.msra.mxu0 %v168
    %349 = vmatprep.subr.mxu0 0.0
    %350 = vmatpush2.xpose.msra.mxu0 0.0
    %351 = vmatprep.subr.mxu0 0.0
    %352 = vmatpush2.xpose.msra.mxu0 0.0
    %353 = vmatprep.subr.mxu0 0.0
    %354 = vmatpush2.xpose.msra.mxu0 0.0
    %355 = vmatprep.subr.mxu0 0.0
    %356 = vmatpush2.xpose.msra.mxu0 0.0
    %357 = vmatprep.subr.mxu0 0.0
    %358 = vmatpush2.xpose.msra.mxu0 0.0
    %359 = vmatprep.subr.mxu0 0.0
    %360 = vmatpush2.xpose.msra.mxu0 0.0
    %361 = vmatprep.subr.mxu0 0.0
    %362 = vmatpush2.xpose.msra.mxu0 0.0
    %363 = vmatprep.subr.mxu0 0.0
    %364 = vmatpush2.xpose.msra.mxu0 0.0
    %365 = vmatprep.subr.mxu0 0.0
    %366 = vmatpush2.xpose.msra.mxu0 0.0
    %367 = vmatprep.subr.mxu0 0.0
    %368 = vmatpush2.xpose.msra.mxu0 0.0
    %369 = vmatprep.subr.mxu0 0.0
    %370 = vmatpush2.xpose.msra.mxu0 0.0
    %371 = vmatprep.subr.mxu0 0.0
    %372 = vmatpush2.xpose.msra.mxu0 0.0
    %373 = vmatprep.subr.mxu0 0.0
    %374 = vmatpush2.xpose.msra.mxu0 0.0
    %375 = vmatprep.subr.mxu0 0.0
    %376 = vmatpush2.xpose.msra.mxu0 0.0
    %377 = vmatprep.subr.mxu0 0.0
    %378 = vmatpush2.xpose.msra.mxu0 0.0
    %379 = vmatprep.subr.mxu0 0.0
    %380 = vmatpush2.xpose.msra.mxu0 0.0
    %381 = vmatprep.mubr.f32.mxu0 0.0
    %382 = vmatmul.mubr.f32.gmra.mxu0 %v166
    %v383 = vpop.f32.mrf.mxu0
    %v384 = vadd.f32 0.0, %v383
    %v385 = vpop.f32.mrf.mxu0
    %386 = vdwg.mxu0
    %387 = vmatprep.subr.mxu0 0.0
    %388 = vmatpush1.xpose.msra.mxu0 0.0
    %389 = vmatprep.subr.mxu0 0.0
    %390 = vmatpush1.xpose.msra.mxu0 0.0
    %391 = vmatprep.subr.mxu0 0.0
    %392 = vmatpush1.xpose.msra.mxu0 0.0
    %393 = vmatprep.subr.mxu0 0.0
    %394 = vmatpush1.xpose.msra.mxu0 0.0
    %395 = vmatprep.subr.mxu0 0.0
    %396 = vmatpush1.xpose.msra.mxu0 0.0
    %397 = vmatprep.subr.mxu0 0.0
    %398 = vmatpush1.xpose.msra.mxu0 0.0
    %399 = vmatprep.subr.mxu0 0.0
    %400 = vmatpush1.xpose.msra.mxu0 0.0
    %401 = vmatprep.subr.mxu0 0.0
    %402 = vmatpush1.xpose.msra.mxu0 0.0
    %403 = vmatprep.subr.mxu0 0.0
    %404 = vmatpush1.xpose.msra.mxu0 0.0
    %405 = vmatprep.subr.mxu0 0.0
    %406 = vmatpush1.xpose.msra.mxu0 0.0
    %407 = vmatprep.subr.mxu0 0.0
    %408 = vmatpush1.xpose.msra.mxu0 0.0
    %409 = vmatprep.subr.mxu0 0.0
    %410 = vmatpush1.xpose.msra.mxu0 0.0
    %411 = vmatprep.subr.mxu0 0.0
    %412 = vmatpush1.xpose.msra.mxu0 0.0
    %413 = vmatprep.subr.mxu0 0.0
    %414 = vmatpush1.xpose.msra.mxu0 0.0
    %415 = vmatprep.subr.mxu0 0.0
    %416 = vmatpush1.xpose.msra.mxu0 0.0
    %417 = vmatprep.subr.mxu0 0.0
    %418 = vmatpush1.xpose.msra.mxu0 %v174
    %419 = vmatprep.subr.mxu0 0.0
    %420 = vmatpush2.xpose.msra.mxu0 0.0
    %421 = vmatprep.subr.mxu0 0.0
    %422 = vmatpush2.xpose.msra.mxu0 0.0
    %423 = vmatprep.subr.mxu0 0.0
    %424 = vmatpush2.xpose.msra.mxu0 0.0
    %425 = vmatprep.subr.mxu0 0.0
    %426 = vmatpush2.xpose.msra.mxu0 0.0
    %427 = vmatprep.subr.mxu0 0.0
    %428 = vmatpush2.xpose.msra.mxu0 0.0
    %429 = vmatprep.subr.mxu0 0.0
    %430 = vmatpush2.xpose.msra.mxu0 0.0
    %431 = vmatprep.subr.mxu0 0.0
    %432 = vmatpush2.xpose.msra.mxu0 0.0
    %433 = vmatprep.subr.mxu0 0.0
    %434 = vmatpush2.xpose.msra.mxu0 0.0
    %435 = vmatprep.subr.mxu0 0.0
    %436 = vmatpush2.xpose.msra.mxu0 0.0
    %437 = vmatprep.subr.mxu0 0.0
    %438 = vmatpush2.xpose.msra.mxu0 0.0
    %439 = vmatprep.subr.mxu0 0.0
    %440 = vmatpush2.xpose.msra.mxu0 0.0
    %441 = vmatprep.subr.mxu0 0.0
    %442 = vmatpush2.xpose.msra.mxu0 0.0
    %443 = vmatprep.subr.mxu0 0.0
    %444 = vmatpush2.xpose.msra.mxu0 0.0
    %445 = vmatprep.subr.mxu0 0.0
    %446 = vmatpush2.xpose.msra.mxu0 0.0
    %447 = vmatprep.subr.mxu0 0.0
    %448 = vmatpush2.xpose.msra.mxu0 0.0
    %449 = vmatprep.subr.mxu0 0.0
    %450 = vmatpush2.xpose.msra.mxu0 0.0
    %451 = vmatprep.mubr.f32.mxu0 0.0
    %452 = vmatmul.mubr.f32.gmra.mxu0 %v172
    %v453 = vpop.f32.mrf.mxu0
    %v454 = vadd.f32 0.0, %v453
    %v455 = vpop.f32.mrf.mxu0
    %456 = vdwg.mxu0
    %457 = vmatprep.subr.mxu0 0.0
    %458 = vmatpush1.xpose.msra.mxu0 0.0
    %459 = vmatprep.subr.mxu0 0.0
    %460 = vmatpush1.xpose.msra.mxu0 0.0
    %461 = vmatprep.subr.mxu0 0.0
    %462 = vmatpush1.xpose.msra.mxu0 0.0
    %463 = vmatprep.subr.mxu0 0.0
    %464 = vmatpush1.xpose.msra.mxu0 0.0
    %465 = vmatprep.subr.mxu0 0.0
    %466 = vmatpush1.xpose.msra.mxu0 0.0
    %467 = vmatprep.subr.mxu0 0.0
    %468 = vmatpush1.xpose.msra.mxu0 0.0
    %469 = vmatprep.subr.mxu0 0.0
    %470 = vmatpush1.xpose.msra.mxu0 0.0
    %471 = vmatprep.subr.mxu0 0.0
    %472 = vmatpush1.xpose.msra.mxu0 0.0
    %473 = vmatprep.subr.mxu0 0.0
    %474 = vmatpush1.xpose.msra.mxu0 0.0
    %475 = vmatprep.subr.mxu0 0.0
    %476 = vmatpush1.xpose.msra.mxu0 0.0
    %477 = vmatprep.subr.mxu0 0.0
    %478 = vmatpush1.xpose.msra.mxu0 0.0
    %479 = vmatprep.subr.mxu0 0.0
    %480 = vmatpush1.xpose.msra.mxu0 0.0
    %481 = vmatprep.subr.mxu0 0.0
    %482 = vmatpush1.xpose.msra.mxu0 0.0
    %483 = vmatprep.subr.mxu0 0.0
    %484 = vmatpush1.xpose.msra.mxu0 0.0
    %485 = vmatprep.subr.mxu0 0.0
    %486 = vmatpush1.xpose.msra.mxu0 0.0
    %487 = vmatprep.subr.mxu0 0.0
    %488 = vmatpush1.xpose.msra.mxu0 %v180
    %489 = vmatprep.subr.mxu0 0.0
    %490 = vmatpush2.xpose.msra.mxu0 0.0
    %491 = vmatprep.subr.mxu0 0.0
    %492 = vmatpush2.xpose.msra.mxu0 0.0
    %493 = vmatprep.subr.mxu0 0.0
    %494 = vmatpush2.xpose.msra.mxu0 0.0
    %495 = vmatprep.subr.mxu0 0.0
    %496 = vmatpush2.xpose.msra.mxu0 0.0
    %497 = vmatprep.subr.mxu0 0.0
    %498 = vmatpush2.xpose.msra.mxu0 0.0
    %499 = vmatprep.subr.mxu0 0.0
    %500 = vmatpush2.xpose.msra.mxu0 0.0
    %501 = vmatprep.subr.mxu0 0.0
    %502 = vmatpush2.xpose.msra.mxu0 0.0
    %503 = vmatprep.subr.mxu0 0.0
    %504 = vmatpush2.xpose.msra.mxu0 0.0
    %505 = vmatprep.subr.mxu0 0.0
    %506 = vmatpush2.xpose.msra.mxu0 0.0
    %507 = vmatprep.subr.mxu0 0.0
    %508 = vmatpush2.xpose.msra.mxu0 0.0
    %509 = vmatprep.subr.mxu0 0.0
    %510 = vmatpush2.xpose.msra.mxu0 0.0
    %511 = vmatprep.subr.mxu0 0.0
    %512 = vmatpush2.xpose.msra.mxu0 0.0
    %513 = vmatprep.subr.mxu0 0.0
    %514 = vmatpush2.xpose.msra.mxu0 0.0
    %515 = vmatprep.subr.mxu0 0.0
    %516 = vmatpush2.xpose.msra.mxu0 0.0
    %517 = vmatprep.subr.mxu0 0.0
    %518 = vmatpush2.xpose.msra.mxu0 0.0
    %519 = vmatprep.subr.mxu0 0.0
    %520 = vmatpush2.xpose.msra.mxu0 0.0
    %521 = vmatprep.mubr.f32.mxu0 0.0
    %522 = vmatmul.mubr.f32.gmra.mxu0 %v178
    %v523 = vpop.f32.mrf.mxu0
    %v524 = vadd.f32 0.0, %v523
    %v525 = vpop.f32.mrf.mxu0
    %526 = vdwg.mxu0
    %527 = vmatprep.subr.mxu0 0.0
    %528 = vmatpush1.xpose.msra.mxu0 0.0
    %529 = vmatprep.subr.mxu0 0.0
    %530 = vmatpush1.xpose.msra.mxu0 0.0
    %531 = vmatprep.subr.mxu0 0.0
    %532 = vmatpush1.xpose.msra.mxu0 0.0
    %533 = vmatprep.subr.mxu0 0.0
    %534 = vmatpush1.xpose.msra.mxu0 0.0
    %535 = vmatprep.subr.mxu0 0.0
    %536 = vmatpush1.xpose.msra.mxu0 0.0
    %537 = vmatprep.subr.mxu0 0.0
    %538 = vmatpush1.xpose.msra.mxu0 0.0
    %539 = vmatprep.subr.mxu0 0.0
    %540 = vmatpush1.xpose.msra.mxu0 0.0
    %541 = vmatprep.subr.mxu0 0.0
    %542 = vmatpush1.xpose.msra.mxu0 0.0
    %543 = vmatprep.subr.mxu0 0.0
    %544 = vmatpush1.xpose.msra.mxu0 0.0
    %545 = vmatprep.subr.mxu0 0.0
    %546 = vmatpush1.xpose.msra.mxu0 0.0
    %547 = vmatprep.subr.mxu0 0.0
    %548 = vmatpush1.xpose.msra.mxu0 0.0
    %549 = vmatprep.subr.mxu0 0.0
    %550 = vmatpush1.xpose.msra.mxu0 0.0
    %551 = vmatprep.subr.mxu0 0.0
    %552 = vmatpush1.xpose.msra.mxu0 0.0
    %553 = vmatprep.subr.mxu0 0.0
    %554 = vmatpush1.xpose.msra.mxu0 0.0
    %555 = vmatprep.subr.mxu0 0.0
    %556 = vmatpush1.xpose.msra.mxu0 0.0
    %557 = vmatprep.subr.mxu0 0.0
    %558 = vmatpush1.xpose.msra.mxu0 %v186
    %559 = vmatprep.subr.mxu0 0.0
    %560 = vmatpush2.xpose.msra.mxu0 0.0
    %561 = vmatprep.subr.mxu0 0.0
    %562 = vmatpush2.xpose.msra.mxu0 0.0
    %563 = vmatprep.subr.mxu0 0.0
    %564 = vmatpush2.xpose.msra.mxu0 0.0
    %565 = vmatprep.subr.mxu0 0.0
    %566 = vmatpush2.xpose.msra.mxu0 0.0
    %567 = vmatprep.subr.mxu0 0.0
    %568 = vmatpush2.xpose.msra.mxu0 0.0
    %569 = vmatprep.subr.mxu0 0.0
    %570 = vmatpush2.xpose.msra.mxu0 0.0
    %571 = vmatprep.subr.mxu0 0.0
    %572 = vmatpush2.xpose.msra.mxu0 0.0
    %573 = vmatprep.subr.mxu0 0.0
    %574 = vmatpush2.xpose.msra.mxu0 0.0
    %575 = vmatprep.subr.mxu0 0.0
    %576 = vmatpush2.xpose.msra.mxu0 0.0
    %577 = vmatprep.subr.mxu0 0.0
    %578 = vmatpush2.xpose.msra.mxu0 0.0
    %579 = vmatprep.subr.mxu0 0.0
    %580 = vmatpush2.xpose.msra.mxu0 0.0
    %581 = vmatprep.subr.mxu0 0.0
    %582 = vmatpush2.xpose.msra.mxu0 0.0
    %583 = vmatprep.subr.mxu0 0.0
    %584 = vmatpush2.xpose.msra.mxu0 0.0
    %585 = vmatprep.subr.mxu0 0.0
    %586 = vmatpush2.xpose.msra.mxu0 0.0
    %587 = vmatprep.subr.mxu0 0.0
    %588 = vmatpush2.xpose.msra.mxu0 0.0
    %589 = vmatprep.subr.mxu0 0.0
    %590 = vmatpush2.xpose.msra.mxu0 0.0
    %591 = vmatprep.mubr.f32.mxu0 0.0
    %592 = vmatmul.mubr.f32.gmra.mxu0 %v184
    %v593 = vpop.f32.mrf.mxu0
    %v594 = vadd.f32 0.0, %v593
    %v595 = vpop.f32.mrf.mxu0
    %596 = vdwg.mxu0
    %597 = vmatprep.subr.mxu0 0.0
    %598 = vmatpush1.xpose.msra.mxu0 0.0
    %599 = vmatprep.subr.mxu0 0.0
    %600 = vmatpush1.xpose.msra.mxu0 0.0
    %601 = vmatprep.subr.mxu0 0.0
    %602 = vmatpush1.xpose.msra.mxu0 0.0
    %603 = vmatprep.subr.mxu0 0.0
    %604 = vmatpush1.xpose.msra.mxu0 0.0
    %605 = vmatprep.subr.mxu0 0.0
    %606 = vmatpush1.xpose.msra.mxu0 0.0
    %607 = vmatprep.subr.mxu0 0.0
    %608 = vmatpush1.xpose.msra.mxu0 0.0
    %609 = vmatprep.subr.mxu0 0.0
    %610 = vmatpush1.xpose.msra.mxu0 0.0
    %611 = vmatprep.subr.mxu0 0.0
    %612 = vmatpush1.xpose.msra.mxu0 0.0
    %613 = vmatprep.subr.mxu0 0.0
    %614 = vmatpush1.xpose.msra.mxu0 0.0
    %615 = vmatprep.subr.mxu0 0.0
    %616 = vmatpush1.xpose.msra.mxu0 0.0
    %617 = vmatprep.subr.mxu0 0.0
    %618 = vmatpush1.xpose.msra.mxu0 0.0
    %619 = vmatprep.subr.mxu0 0.0
    %620 = vmatpush1.xpose.msra.mxu0 0.0
    %621 = vmatprep.subr.mxu0 0.0
    %622 = vmatpush1.xpose.msra.mxu0 0.0
    %623 = vmatprep.subr.mxu0 0.0
    %624 = vmatpush1.xpose.msra.mxu0 0.0
    %625 = vmatprep.subr.mxu0 0.0
    %626 = vmatpush1.xpose.msra.mxu0 0.0
    %627 = vmatprep.subr.mxu0 0.0
    %628 = vmatpush1.xpose.msra.mxu0 %v192
    %629 = vmatprep.subr.mxu0 0.0
    %630 = vmatpush2.xpose.msra.mxu0 0.0
    %631 = vmatprep.subr.mxu0 0.0
    %632 = vmatpush2.xpose.msra.mxu0 0.0
    %633 = vmatprep.subr.mxu0 0.0
    %634 = vmatpush2.xpose.msra.mxu0 0.0
    %635 = vmatprep.subr.mxu0 0.0
    %636 = vmatpush2.xpose.msra.mxu0 0.0
    %637 = vmatprep.subr.mxu0 0.0
    %638 = vmatpush2.xpose.msra.mxu0 0.0
    %639 = vmatprep.subr.mxu0 0.0
    %640 = vmatpush2.xpose.msra.mxu0 0.0
    %641 = vmatprep.subr.mxu0 0.0
    %642 = vmatpush2.xpose.msra.mxu0 0.0
    %643 = vmatprep.subr.mxu0 0.0
    %644 = vmatpush2.xpose.msra.mxu0 0.0
    %645 = vmatprep.subr.mxu0 0.0
    %646 = vmatpush2.xpose.msra.mxu0 0.0
    %647 = vmatprep.subr.mxu0 0.0
    %648 = vmatpush2.xpose.msra.mxu0 0.0
    %649 = vmatprep.subr.mxu0 0.0
    %650 = vmatpush2.xpose.msra.mxu0 0.0
    %651 = vmatprep.subr.mxu0 0.0
    %652 = vmatpush2.xpose.msra.mxu0 0.0
    %653 = vmatprep.subr.mxu0 0.0
    %654 = vmatpush2.xpose.msra.mxu0 0.0
    %655 = vmatprep.subr.mxu0 0.0
    %656 = vmatpush2.xpose.msra.mxu0 0.0
    %657 = vmatprep.subr.mxu0 0.0
    %658 = vmatpush2.xpose.msra.mxu0 0.0
    %659 = vmatprep.subr.mxu0 0.0
    %660 = vmatpush2.xpose.msra.mxu0 0.0
    %661 = vmatprep.mubr.f32.mxu0 0.0
    %662 = vmatmul.mubr.f32.gmra.mxu0 %v190
    %v663 = vpop.f32.mrf.mxu0
    %v664 = vadd.f32 0.0, %v663
    %v665 = vpop.f32.mrf.mxu0
    %666 = vdwg.mxu0
    %667 = vmatprep.subr.mxu0 0.0
    %668 = vmatpush1.xpose.msra.mxu0 0.0
    %669 = vmatprep.subr.mxu0 0.0
    %670 = vmatpush1.xpose.msra.mxu0 0.0
    %671 = vmatprep.subr.mxu0 0.0
    %672 = vmatpush1.xpose.msra.mxu0 0.0
    %673 = vmatprep.subr.mxu0 0.0
    %674 = vmatpush1.xpose.msra.mxu0 0.0
    %675 = vmatprep.subr.mxu0 0.0
    %676 = vmatpush1.xpose.msra.mxu0 0.0
    %677 = vmatprep.subr.mxu0 0.0
    %678 = vmatpush1.xpose.msra.mxu0 0.0
    %679 = vmatprep.subr.mxu0 0.0
    %680 = vmatpush1.xpose.msra.mxu0 0.0
    %681 = vmatprep.subr.mxu0 0.0
    %682 = vmatpush1.xpose.msra.mxu0 0.0
    %683 = vmatprep.subr.mxu0 0.0
    %684 = vmatpush1.xpose.msra.mxu0 0.0
    %685 = vmatprep.subr.mxu0 0.0
    %686 = vmatpush1.xpose.msra.mxu0 0.0
    %687 = vmatprep.subr.mxu0 0.0
    %688 = vmatpush1.xpose.msra.mxu0 0.0
    %689 = vmatprep.subr.mxu0 0.0
    %690 = vmatpush1.xpose.msra.mxu0 0.0
    %691 = vmatprep.subr.mxu0 0.0
    %692 = vmatpush1.xpose.msra.mxu0 0.0
    %693 = vmatprep.subr.mxu0 0.0
    %694 = vmatpush1.xpose.msra.mxu0 0.0
    %695 = vmatprep.subr.mxu0 0.0
    %696 = vmatpush1.xpose.msra.mxu0 0.0
    %697 = vmatprep.subr.mxu0 0.0
    %698 = vmatpush1.xpose.msra.mxu0 %v198
    %699 = vmatprep.subr.mxu0 0.0
    %700 = vmatpush2.xpose.msra.mxu0 0.0
    %701 = vmatprep.subr.mxu0 0.0
    %702 = vmatpush2.xpose.msra.mxu0 0.0
    %703 = vmatprep.subr.mxu0 0.0
    %704 = vmatpush2.xpose.msra.mxu0 0.0
    %705 = vmatprep.subr.mxu0 0.0
    %706 = vmatpush2.xpose.msra.mxu0 0.0
    %707 = vmatprep.subr.mxu0 0.0
    %708 = vmatpush2.xpose.msra.mxu0 0.0
    %709 = vmatprep.subr.mxu0 0.0
    %710 = vmatpush2.xpose.msra.mxu0 0.0
    %711 = vmatprep.subr.mxu0 0.0
    %712 = vmatpush2.xpose.msra.mxu0 0.0
    %713 = vmatprep.subr.mxu0 0.0
    %714 = vmatpush2.xpose.msra.mxu0 0.0
    %715 = vmatprep.subr.mxu0 0.0
    %716 = vmatpush2.xpose.msra.mxu0 0.0
    %717 = vmatprep.subr.mxu0 0.0
    %718 = vmatpush2.xpose.msra.mxu0 0.0
    %719 = vmatprep.subr.mxu0 0.0
    %720 = vmatpush2.xpose.msra.mxu0 0.0
    %721 = vmatprep.subr.mxu0 0.0
    %722 = vmatpush2.xpose.msra.mxu0 0.0
    %723 = vmatprep.subr.mxu0 0.0
    %724 = vmatpush2.xpose.msra.mxu0 0.0
    %725 = vmatprep.subr.mxu0 0.0
    %726 = vmatpush2.xpose.msra.mxu0 0.0
    %727 = vmatprep.subr.mxu0 0.0
    %728 = vmatpush2.xpose.msra.mxu0 0.0
    %729 = vmatprep.subr.mxu0 0.0
    %730 = vmatpush2.xpose.msra.mxu0 0.0
    %731 = vmatprep.mubr.f32.mxu0 0.0
    %732 = vmatmul.mubr.f32.gmra.mxu0 %v196
    %v733 = vpop.f32.mrf.mxu0
    %v734 = vadd.f32 0.0, %v733
    %v735 = vpop.f32.mrf.mxu0
    %736 = vdwg.mxu0
    %737 = vmatprep.subr.mxu0 0.0
    %738 = vmatpush1.xpose.msra.mxu0 0.0
    %739 = vmatprep.subr.mxu0 0.0
    %740 = vmatpush1.xpose.msra.mxu0 0.0
    %741 = vmatprep.subr.mxu0 0.0
    %742 = vmatpush1.xpose.msra.mxu0 0.0
    %743 = vmatprep.subr.mxu0 0.0
    %744 = vmatpush1.xpose.msra.mxu0 0.0
    %745 = vmatprep.subr.mxu0 0.0
    %746 = vmatpush1.xpose.msra.mxu0 0.0
    %747 = vmatprep.subr.mxu0 0.0
    %748 = vmatpush1.xpose.msra.mxu0 0.0
    %749 = vmatprep.subr.mxu0 0.0
    %750 = vmatpush1.xpose.msra.mxu0 0.0
    %751 = vmatprep.subr.mxu0 0.0
    %752 = vmatpush1.xpose.msra.mxu0 0.0
    %753 = vmatprep.subr.mxu0 0.0
    %754 = vmatpush1.xpose.msra.mxu0 0.0
    %755 = vmatprep.subr.mxu0 0.0
    %756 = vmatpush1.xpose.msra.mxu0 0.0
    %757 = vmatprep.subr.mxu0 0.0
    %758 = vmatpush1.xpose.msra.mxu0 0.0
    %759 = vmatprep.subr.mxu0 0.0
    %760 = vmatpush1.xpose.msra.mxu0 0.0
    %761 = vmatprep.subr.mxu0 0.0
    %762 = vmatpush1.xpose.msra.mxu0 0.0
    %763 = vmatprep.subr.mxu0 0.0
    %764 = vmatpush1.xpose.msra.mxu0 0.0
    %765 = vmatprep.subr.mxu0 0.0
    %766 = vmatpush1.xpose.msra.mxu0 0.0
    %767 = vmatprep.subr.mxu0 0.0
    %768 = vmatpush1.xpose.msra.mxu0 %v204
    %769 = vmatprep.subr.mxu0 0.0
    %770 = vmatpush2.xpose.msra.mxu0 0.0
    %771 = vmatprep.subr.mxu0 0.0
    %772 = vmatpush2.xpose.msra.mxu0 0.0
    %773 = vmatprep.subr.mxu0 0.0
    %774 = vmatpush2.xpose.msra.mxu0 0.0
    %775 = vmatprep.subr.mxu0 0.0
    %776 = vmatpush2.xpose.msra.mxu0 0.0
    %777 = vmatprep.subr.mxu0 0.0
    %778 = vmatpush2.xpose.msra.mxu0 0.0
    %779 = vmatprep.subr.mxu0 0.0
    %780 = vmatpush2.xpose.msra.mxu0 0.0
    %781 = vmatprep.subr.mxu0 0.0
    %782 = vmatpush2.xpose.msra.mxu0 0.0
    %783 = vmatprep.subr.mxu0 0.0
    %784 = vmatpush2.xpose.msra.mxu0 0.0
    %785 = vmatprep.subr.mxu0 0.0
    %786 = vmatpush2.xpose.msra.mxu0 0.0
    %787 = vmatprep.subr.mxu0 0.0
    %788 = vmatpush2.xpose.msra.mxu0 0.0
    %789 = vmatprep.subr.mxu0 0.0
    %790 = vmatpush2.xpose.msra.mxu0 0.0
    %791 = vmatprep.subr.mxu0 0.0
    %792 = vmatpush2.xpose.msra.mxu0 0.0
    %793 = vmatprep.subr.mxu0 0.0
    %794 = vmatpush2.xpose.msra.mxu0 0.0
    %795 = vmatprep.subr.mxu0 0.0
    %796 = vmatpush2.xpose.msra.mxu0 0.0
    %797 = vmatprep.subr.mxu0 0.0
    %798 = vmatpush2.xpose.msra.mxu0 0.0
    %799 = vmatprep.subr.mxu0 0.0
    %800 = vmatpush2.xpose.msra.mxu0 0.0
    %801 = vmatprep.mubr.f32.mxu0 0.0
    %802 = vmatmul.mubr.f32.gmra.mxu0 %v202
    %v803 = vpop.f32.mrf.mxu0
    %v804 = vadd.f32 0.0, %v803
    %v805 = vpop.f32.mrf.mxu0
    %806 = vdwg.mxu0
    %807 = vmatprep.subr.mxu0 0.0
    %808 = vmatpush1.xpose.msra.mxu0 0.0
    %809 = vmatprep.subr.mxu0 0.0
    %810 = vmatpush1.xpose.msra.mxu0 0.0
    %811 = vmatprep.subr.mxu0 0.0
    %812 = vmatpush1.xpose.msra.mxu0 0.0
    %813 = vmatprep.subr.mxu0 0.0
    %814 = vmatpush1.xpose.msra.mxu0 0.0
    %815 = vmatprep.subr.mxu0 0.0
    %816 = vmatpush1.xpose.msra.mxu0 0.0
    %817 = vmatprep.subr.mxu0 0.0
    %818 = vmatpush1.xpose.msra.mxu0 0.0
    %819 = vmatprep.subr.mxu0 0.0
    %820 = vmatpush1.xpose.msra.mxu0 0.0
    %821 = vmatprep.subr.mxu0 0.0
    %822 = vmatpush1.xpose.msra.mxu0 0.0
    %823 = vmatprep.subr.mxu0 0.0
    %824 = vmatpush1.xpose.msra.mxu0 0.0
    %825 = vmatprep.subr.mxu0 0.0
    %826 = vmatpush1.xpose.msra.mxu0 0.0
    %827 = vmatprep.subr.mxu0 0.0
    %828 = vmatpush1.xpose.msra.mxu0 0.0
    %829 = vmatprep.subr.mxu0 0.0
    %830 = vmatpush1.xpose.msra.mxu0 0.0
    %831 = vmatprep.subr.mxu0 0.0
    %832 = vmatpush1.xpose.msra.mxu0 0.0
    %833 = vmatprep.subr.mxu0 0.0
    %834 = vmatpush1.xpose.msra.mxu0 0.0
    %835 = vmatprep.subr.mxu0 0.0
    %836 = vmatpush1.xpose.msra.mxu0 0.0
    %837 = vmatprep.subr.mxu0 0.0
    %838 = vmatpush1.xpose.msra.mxu0 %v210
    %839 = vmatprep.subr.mxu0 0.0
    %840 = vmatpush2.xpose.msra.mxu0 0.0
    %841 = vmatprep.subr.mxu0 0.0
    %842 = vmatpush2.xpose.msra.mxu0 0.0
    %843 = vmatprep.subr.mxu0 0.0
    %844 = vmatpush2.xpose.msra.mxu0 0.0
    %845 = vmatprep.subr.mxu0 0.0
    %846 = vmatpush2.xpose.msra.mxu0 0.0
    %847 = vmatprep.subr.mxu0 0.0
    %848 = vmatpush2.xpose.msra.mxu0 0.0
    %849 = vmatprep.subr.mxu0 0.0
    %850 = vmatpush2.xpose.msra.mxu0 0.0
    %851 = vmatprep.subr.mxu0 0.0
    %852 = vmatpush2.xpose.msra.mxu0 0.0
    %853 = vmatprep.subr.mxu0 0.0
    %854 = vmatpush2.xpose.msra.mxu0 0.0
    %855 = vmatprep.subr.mxu0 0.0
    %856 = vmatpush2.xpose.msra.mxu0 0.0
    %857 = vmatprep.subr.mxu0 0.0
    %858 = vmatpush2.xpose.msra.mxu0 0.0
    %859 = vmatprep.subr.mxu0 0.0
    %860 = vmatpush2.xpose.msra.mxu0 0.0
    %861 = vmatprep.subr.mxu0 0.0
    %862 = vmatpush2.xpose.msra.mxu0 0.0
    %863 = vmatprep.subr.mxu0 0.0
    %864 = vmatpush2.xpose.msra.mxu0 0.0
    %865 = vmatprep.subr.mxu0 0.0
    %866 = vmatpush2.xpose.msra.mxu0 0.0
    %867 = vmatprep.subr.mxu0 0.0
    %868 = vmatpush2.xpose.msra.mxu0 0.0
    %869 = vmatprep.subr.mxu0 0.0
    %870 = vmatpush2.xpose.msra.mxu0 0.0
    %871 = vmatprep.mubr.f32.mxu0 0.0
    %872 = vmatmul.mubr.f32.gmra.mxu0 %v208
    %v873 = vpop.f32.mrf.mxu0
    %v874 = vadd.f32 0.0, %v873
    %v875 = vpop.f32.mrf.mxu0
    %876 = vdwg.mxu0
    %v877 = vmul.f32 %v384, 0.17677669
    %v878 = vmul.f32 %v454, 0.17677669
    %v879 = vmul.f32 %v524, 0.17677669
    %v880 = vmul.f32 %v594, 0.17677669
    %v881 = vmul.f32 %v664, 0.17677669
    %v882 = vmul.f32 %v734, 0.17677669
    %v883 = vmul.f32 %v804, 0.17677669
    %v884 = vmul.f32 %v874, 0.17677669
    %vm885 = vcmask 64512
    %v886 = vsel %vm885, %v877, -inf
    %887 = vmax.xlane.f32.xlu0 %v886
    %v888 = vpop.xlane.xlu0 %887
    %v889 = vsel %vm885, %v878, -inf
    %890 = vmax.xlane.f32.xlu0 %v889
    %v891 = vpop.xlane.xlu0 %890
    %v892 = vsel %vm885, %v879, -inf
    %893 = vmax.xlane.f32.xlu0 %v892
    %v894 = vpop.xlane.xlu0 %893
    %v895 = vsel %vm885, %v880, -inf
    %896 = vmax.xlane.f32.xlu0 %v895
    %v897 = vpop.xlane.xlu0 %896
    %v898 = vsel %vm885, %v881, -inf
    %899 = vmax.xlane.f32.xlu0 %v898
    %v900 = vpop.xlane.xlu0 %899
    %v901 = vsel %vm885, %v882, -inf
    %902 = vmax.xlane.f32.xlu0 %v901
    %v903 = vpop.xlane.xlu0 %902
    %v904 = vsel %vm885, %v883, -inf
    %905 = vmax.xlane.f32.xlu0 %v904
    %v906 = vpop.xlane.xlu0 %905
    %v907 = vsel %vm885, %v884, -inf
    %908 = vmax.xlane.f32.xlu0 %v907
    %v909 = vpop.xlane.xlu0 %908
    %v910 = vsub.f32 %v877, %v888
    %v911 = vsub.f32 %v878, %v891
    %v912 = vsub.f32 %v879, %v894
    %v913 = vsub.f32 %v880, %v897
    %v914 = vsub.f32 %v881, %v900
    %v915 = vsub.f32 %v882, %v903
    %v916 = vsub.f32 %v883, %v906
    %v917 = vsub.f32 %v884, %v909
    %v918 = vmul.f32 %v910, 1.442695
    %v919 = vpow.pop %v918
    %v920 = vmul.f32 %v911, 1.442695
    %v921 = vpow.pop %v920
    %v922 = vmul.f32 %v912, 1.442695
    %v923 = vpow.pop %v922
    %v924 = vmul.f32 %v913, 1.442695
    %v925 = vpow.pop %v924
    %v926 = vmul.f32 %v914, 1.442695
    %v927 = vpow.pop %v926
    %v928 = vmul.f32 %v915, 1.442695
    %v929 = vpow.pop %v928
    %v930 = vmul.f32 %v916, 1.442695
    %v931 = vpow.pop %v930
    %v932 = vmul.f32 %v917, 1.442695
    %v933 = vpow.pop %v932
    %v934 = vsel %vm885, %v919, 0.0
    %935 = vadd.xlane.f32.xlu0 %v934
    %v936 = vpop.xlane.xlu0 %935
    %v937 = vsel %vm885, %v921, 0.0
    %938 = vadd.xlane.f32.xlu0 %v937
    %v939 = vpop.xlane.xlu0 %938
    %v940 = vsel %vm885, %v923, 0.0
    %941 = vadd.xlane.f32.xlu0 %v940
    %v942 = vpop.xlane.xlu0 %941
    %v943 = vsel %vm885, %v925, 0.0
    %944 = vadd.xlane.f32.xlu0 %v943
    %v945 = vpop.xlane.xlu0 %944
    %v946 = vsel %vm885, %v927, 0.0
    %947 = vadd.xlane.f32.xlu0 %v946
    %v948 = vpop.xlane.xlu0 %947
    %v949 = vsel %vm885, %v929, 0.0
    %950 = vadd.xlane.f32.xlu0 %v949
    %v951 = vpop.xlane.xlu0 %950
    %v952 = vsel %vm885, %v931, 0.0
    %953 = vadd.xlane.f32.xlu0 %v952
    %v954 = vpop.xlane.xlu0 %953
    %v955 = vsel %vm885, %v933, 0.0
    %956 = vadd.xlane.f32.xlu0 %v955
    %v957 = vpop.xlane.xlu0 %956
    %v958 = vrcp.pop %v936
    %v959 = vmul.f32 %v919, %v958
    %v960 = vrcp.pop %v939
    %v961 = vmul.f32 %v921, %v960
    %v962 = vrcp.pop %v942
    %v963 = vmul.f32 %v923, %v962
    %v964 = vrcp.pop %v945
    %v965 = vmul.f32 %v925, %v964
    %v966 = vrcp.pop %v948
    %v967 = vmul.f32 %v927, %v966
    %v968 = vrcp.pop %v951
    %v969 = vmul.f32 %v929, %v968
    %v970 = vrcp.pop %v954
    %v971 = vmul.f32 %v931, %v970
    %v972 = vrcp.pop %v957
    %v973 = vmul.f32 %v933, %v972
    %v974 = vsel %vm885, %v959, 0.0
    %v975 = vrot.slane %v974, 4
    %v976 = vadd.f32 %v974, %v975
    %v977 = vrot.slane %v976, 2
    %v978 = vadd.f32 %v976, %v977
    %v979 = vrot.slane %v978, 1
    %v980 = vadd.f32 %v978, %v979
    %v981 = vsel %vm885, %v961, 0.0
    %v982 = vrot.slane %v981, 4
    %v983 = vadd.f32 %v981, %v982
    %v984 = vrot.slane %v983, 2
    %v985 = vadd.f32 %v983, %v984
    %v986 = vrot.slane %v985, 1
    %v987 = vadd.f32 %v985, %v986
    %v988 = vsel %vm885, %v963, 0.0
    %v989 = vrot.slane %v988, 4
    %v990 = vadd.f32 %v988, %v989
    %v991 = vrot.slane %v990, 2
    %v992 = vadd.f32 %v990, %v991
    %v993 = vrot.slane %v992, 1
    %v994 = vadd.f32 %v992, %v993
    %v995 = vsel %vm885, %v965, 0.0
    %v996 = vrot.slane %v995, 4
    %v997 = vadd.f32 %v995, %v996
    %v998 = vrot.slane %v997, 2
    %v999 = vadd.f32 %v997, %v998
    %v1000 = vrot.slane %v999, 1
    %v1001 = vadd.f32 %v999, %v1000
    %v1002 = vsel %vm885, %v967, 0.0
    %v1003 = vrot.slane %v1002, 4
    %v1004 = vadd.f32 %v1002, %v1003
    %v1005 = vrot.slane %v1004, 2
    %v1006 = vadd.f32 %v1004, %v1005
    %v1007 = vrot.slane %v1006, 1
    %v1008 = vadd.f32 %v1006, %v1007
    %v1009 = vsel %vm885, %v969, 0.0
    %v1010 = vrot.slane %v1009, 4
    %v1011 = vadd.f32 %v1009, %v1010
    %v1012 = vrot.slane %v1011, 2
    %v1013 = vadd.f32 %v1011, %v1012
    %v1014 = vrot.slane %v1013, 1
    %v1015 = vadd.f32 %v1013, %v1014
    %v1016 = vsel %vm885, %v971, 0.0
    %v1017 = vrot.slane %v1016, 4
    %v1018 = vadd.f32 %v1016, %v1017
    %v1019 = vrot.slane %v1018, 2
    %v1020 = vadd.f32 %v1018, %v1019
    %v1021 = vrot.slane %v1020, 1
    %v1022 = vadd.f32 %v1020, %v1021
    %v1023 = vsel %vm885, %v973, 0.0
    %v1024 = vrot.slane %v1023, 4
    %v1025 = vadd.f32 %v1023, %v1024
    %v1026 = vrot.slane %v1025, 2
    %v1027 = vadd.f32 %v1025, %v1026
    %v1028 = vrot.slane %v1027, 1
    %v1029 = vadd.f32 %v1027, %v1028
    %1031 = vbcast.lane.b32.xlu0 %v980, 256
    %v1032 = vpop.permute.xlu0 %1031
    %1034 = vbcast.lane.b32.xlu0 %v987, 256
    %v1035 = vpop.permute.xlu0 %1034
    %1037 = vbcast.lane.b32.xlu0 %v994, 256
    %v1038 = vpop.permute.xlu0 %1037
    %1040 = vbcast.lane.b32.xlu0 %v1001, 256
    %v1041 = vpop.permute.xlu0 %1040
    %1043 = vbcast.lane.b32.xlu0 %v1008, 256
    %v1044 = vpop.permute.xlu0 %1043
    %1046 = vbcast.lane.b32.xlu0 %v1015, 256
    %v1047 = vpop.permute.xlu0 %1046
    %1049 = vbcast.lane.b32.xlu0 %v1022, 256
    %v1050 = vpop.permute.xlu0 %1049
    %1052 = vbcast.lane.b32.xlu0 %v1029, 256
    %v1053 = vpop.permute.xlu0 %1052
    %v1054 = vmul.f32 %v1032, %v279
    %v1055 = vmul.f32 %v1035, %v284
    %v1056 = vmul.f32 %v1038, %v289
    %v1057 = vmul.f32 %v1041, %v294
    %v1058 = vmul.f32 %v1044, %v299
    %v1059 = vmul.f32 %v1047, %v304
    %v1060 = vmul.f32 %v1050, %v309
    %v1061 = vmul.f32 %v1053, %v314
    %v1062 = vrot.slane %v1054, 4
    %v1063 = vadd.f32 %v1054, %v1062
    %v1064 = vrot.slane %v1063, 2
    %v1065 = vadd.f32 %v1063, %v1064
    %v1066 = vrot.slane %v1065, 1
    %v1067 = vadd.f32 %v1065, %v1066
    %v1068 = vrot.slane %v1055, 4
    %v1069 = vadd.f32 %v1055, %v1068
    %v1070 = vrot.slane %v1069, 2
    %v1071 = vadd.f32 %v1069, %v1070
    %v1072 = vrot.slane %v1071, 1
    %v1073 = vadd.f32 %v1071, %v1072
    %v1074 = vrot.slane %v1056, 4
    %v1075 = vadd.f32 %v1056, %v1074
    %v1076 = vrot.slane %v1075, 2
    %v1077 = vadd.f32 %v1075, %v1076
    %v1078 = vrot.slane %v1077, 1
    %v1079 = vadd.f32 %v1077, %v1078
    %v1080 = vrot.slane %v1057, 4
    %v1081 = vadd.f32 %v1057, %v1080
    %v1082 = vrot.slane %v1081, 2
    %v1083 = vadd.f32 %v1081, %v1082
    %v1084 = vrot.slane %v1083, 1
    %v1085 = vadd.f32 %v1083, %v1084
    %v1086 = vrot.slane %v1058, 4
    %v1087 = vadd.f32 %v1058, %v1086
    %v1088 = vrot.slane %v1087, 2
    %v1089 = vadd.f32 %v1087, %v1088
    %v1090 = vrot.slane %v1089, 1
    %v1091 = vadd.f32 %v1089, %v1090
    %v1092 = vrot.slane %v1059, 4
    %v1093 = vadd.f32 %v1059, %v1092
    %v1094 = vrot.slane %v1093, 2
    %v1095 = vadd.f32 %v1093, %v1094
    %v1096 = vrot.slane %v1095, 1
    %v1097 = vadd.f32 %v1095, %v1096
    %v1098 = vrot.slane %v1060, 4
    %v1099 = vadd.f32 %v1060, %v1098
    %v1100 = vrot.slane %v1099, 2
    %v1101 = vadd.f32 %v1099, %v1100
    %v1102 = vrot.slane %v1101, 1
    %v1103 = vadd.f32 %v1101, %v1102
    %v1104 = vrot.slane %v1061, 4
    %v1105 = vadd.f32 %v1061, %v1104
    %v1106 = vrot.slane %v1105, 2
    %v1107 = vadd.f32 %v1105, %v1106
    %v1108 = vrot.slane %v1107, 1
    %v1109 = vadd.f32 %v1107, %v1108
    %vm1118 = vcmask 1041409
    %v1119 = vsel %vm1118, %v1073, %v1067
    %vm1120 = vcmask 1042434
    %v1121 = vsel %vm1120, %v1079, %v1119
    %vm1122 = vcmask 1043459
    %v1123 = vsel %vm1122, %v1085, %v1121
    %vm1124 = vcmask 1044484
    %v1125 = vsel %vm1124, %v1091, %v1123
    %vm1126 = vcmask 1045509
    %v1127 = vsel %vm1126, %v1097, %v1125
    %vm1128 = vcmask 1046534
    %v1129 = vsel %vm1128, %v1103, %v1127
    %vm1130 = vcmask 1047559
    %v1131 = vsel %vm1130, %v1109, %v1129
    %1133 = vst [vmem:[#allocation7] sm:$0xff] %v1131
    // Predicated region
    $region22: #{tpu_custom_call.1} parent=1 // pred_check
      _
    $region23: #{tpu_custom_call.1} parent=1 // pred_check_branch
      %1135 = sbr.rel (0) target = $region25
    $region24: #{tpu_custom_call.1} parent=1 // pred_region
      %s1137 = ssub.s32 128, 32
      %1138 = vsyncadd [#allocation4], %s1137
      %s1139 = sshll.u32 [#allocation7], 4
      %s1140 = int_to_ptr.vmem [resolvable:$true] %s1139
      %1145 = dma.vmem_to_hbm [thread:$0]  %s1140, 32, %s3, [#allocation4], 32, 32, 2
    $region25: #{tpu_custom_call.1} parent=1 // pred_fallthru
      _
    // Predicated region
    $region26: #{tpu_custom_call.1} parent=1 // pred_check
      _
    $region27: #{tpu_custom_call.1} parent=1 // pred_check_branch
      %1147 = sbr.rel (0) target = $region29
    $region28: #{tpu_custom_call.1} parent=1 // pred_region
      %1148 = dma.done [#allocation4], 128
    $region29: #{tpu_custom_call.1} parent=1 // pred_fallthru
      _
    %1149 = vsyncpa [#allocation3], 1
    %1150 = vsyncpa [#allocation6], 1
    %1151 = vsyncpa [#allocation4], 1

</llo_original>
